<compile_context>
chip_gen: v7x
topology: tpu7x:2x2x1
jax: 0.10.0
libtpu: 0.0.40
codegen_flags: <defaults>
</compile_context>

<pallas_src>
import functools

import jax
import jax.numpy as jnp
from jax.experimental import pallas as pl
from jax.experimental.pallas import tpu as pltpu


def _round_up(x, m):
    return ((x + m - 1) // m) * m


def _round_down(x, m):
    return (x // m) * m


def _contrastive_cosine_kernel(pred_ref, pos_ref, neg_ref, o_ref, *, inv_temp, eps):
    # pred_ref / pos_ref / neg_ref: (block_b, D) tiles in VMEM (native dtype).
    # o_ref: (block_b, 1) f32 per-sample losses.
    p = pred_ref[...].astype(jnp.float32)
    a = pos_ref[...].astype(jnp.float32)
    b = neg_ref[...].astype(jnp.float32)

    # Row-wise dot products and squared norms (VPU multiply + XLU reduce).
    dot_pa = jnp.sum(p * a, axis=1, keepdims=True)  # (block_b, 1)
    dot_pb = jnp.sum(p * b, axis=1, keepdims=True)
    p_sq = jnp.sum(p * p, axis=1, keepdims=True)
    a_sq = jnp.sum(a * a, axis=1, keepdims=True)
    b_sq = jnp.sum(b * b, axis=1, keepdims=True)

    # cos = dot / max(|p|*|x|, eps)  ==  dot * rsqrt(max(p_sq*x_sq, eps^2))
    # (rsqrt goes to the EUP slot; no f32 divides, no separate sqrt).
    eps_sq = jnp.float32(eps) * jnp.float32(eps)
    cos_pos = dot_pa * jax.lax.rsqrt(jnp.maximum(p_sq * a_sq, eps_sq))
    cos_neg = dot_pb * jax.lax.rsqrt(jnp.maximum(p_sq * b_sq, eps_sq))

    # -log(exp(cp/t) / (exp(cp/t) + exp(cn/t))) == softplus((cn - cp)/t)
    # Stable softplus: max(d, 0) + log1p(exp(-|d|)) -> one exp + one log1p.
    d = (cos_neg - cos_pos) * jnp.float32(inv_temp)
    o_ref[...] = jnp.maximum(d, 0.0) + jnp.log1p(jnp.exp(-jnp.abs(d)))


def contrastive_loss_cosine(pred, positive, negative, temp, *, eps=1e-8, block_b=None):
    """Pallas TPU implementation of ContrastiveLossCosine.forward.

    pred, positive, negative: (B, D) arrays (any float dtype; streamed natively)
    temp: scalar temperature (Python float)
    returns: (B,) f32 per-sample losses
    """
    B, D = pred.shape
    itemsize = jnp.dtype(pred.dtype).itemsize
    # Sublane packing multiple for the input dtype: 8 (32-bit), 16 (16-bit), 32 (8-bit).
    sublane_mult = max(8, 8 * (4 // max(itemsize, 1)))

    if block_b is None:
        if B <= sublane_mult:
            block_b = B  # full-array block along batch is always legal
        else:
            # VMEM working set per row (lane-padded, double-buffered):
            #   3 inputs : 2 buffers * round_up(D,128) * itemsize each
            #   1 output : 2 buffers * 128 lanes * 4B   ((block_b,1) pads to (block_b,128) f32)
            d_pad = _round_up(D, 128)
            bytes_per_row = 3 * 2 * d_pad * itemsize + 2 * 128 * 4
            budget_bytes = 24 * 1024 * 1024  # under the 32 MiB limit we request below
            max_rows = max(
                sublane_mult,
                _round_down(budget_bytes // bytes_per_row, sublane_mult),
            )
            # Keep >=2 grid steps so the "parallel" axis can shard across both
            # TensorCores on v7x (harmless on single-TC v5e/v6e).
            two_step_cap = _round_up(pl.cdiv(B, 2), sublane_mult)
            block_b = int(min(max_rows, two_step_cap))
    # TODO(synk): D so large that a single sublane_mult-row block exceeds the VMEM
    # budget would need feature-dim tiling with partial-sum accumulators.

    grid = (pl.cdiv(B, block_b),)

    kernel = functools.partial(
        _contrastive_cosine_kernel, inv_temp=1.0 / float(temp), eps=float(eps)
    )

    cost = pl.CostEstimate(
        flops=10 * B * D,                      # 5 row-wise products + adds of length D
        transcendentals=4 * B,                 # 2 rsqrt + 1 exp + 1 log1p per row
        bytes_accessed=3 * B * D * itemsize + B * 4,
    )

    out = pl.pallas_call(
        kernel,
        out_shape=jax.ShapeDtypeStruct((B, 1), jnp.float32),
        grid=grid,
        in_specs=[
            pl.BlockSpec((block_b, D), lambda i: (i, 0)),
            pl.BlockSpec((block_b, D), lambda i: (i, 0)),
            pl.BlockSpec((block_b, D), lambda i: (i, 0)),
        ],
        out_specs=pl.BlockSpec((block_b, 1), lambda i: (i, 0)),
        compiler_params=pltpu.CompilerParams(
            dimension_semantics=("parallel",),
            vmem_limit_bytes=32 * 1024 * 1024,
        ),
        cost_estimate=cost,
    )(pred, positive, negative)
    return out[:, 0]


def _reference(pred, positive, negative, temp, eps=1e-8):
    """Pure-JAX mirror of the PyTorch forward (direct formula, f32)."""
    pred = pred.astype(jnp.float32)
    positive = positive.astype(jnp.float32)
    negative = negative.astype(jnp.float32)

    def cos(a, b):
        dot = jnp.sum(a * b, axis=1)
        na = jnp.sqrt(jnp.sum(a * a, axis=1))
        nb = jnp.sqrt(jnp.sum(b * b, axis=1))
        return dot / jnp.maximum(na * nb, eps)

    cp = jnp.exp(cos(pred, positive) / temp)
    cn = jnp.exp(cos(pred, negative) / temp)
    return -jnp.log(cp / (cp + cn))


if __name__ == "__main__":
    key = jax.random.PRNGKey(0)
    keys = jax.random.split(key, 9)
    temp = 0.5
    RTOL, ATOL = 1e-4, 1e-5

    # Case 1: bf16 inputs streamed natively (no wrapper upcast), B a multiple of
    # the bf16 sublane packing -> block_b=16, grid=(2,) (exercises megacore split).
    B, D = 32, 64
    pred = jax.random.normal(keys[0], (B, D), dtype=jnp.float32).astype(jnp.bfloat16)
    positive = jax.random.normal(keys[1], (B, D), dtype=jnp.float32).astype(jnp.bfloat16)
    negative = jax.random.normal(keys[2], (B, D), dtype=jnp.float32).astype(jnp.bfloat16)
    loss = jax.block_until_ready(contrastive_loss_cosine(pred, positive, negative, temp))
    ref = _reference(pred, positive, negative, temp)
    assert loss.shape == (B,), loss.shape
    assert jnp.allclose(loss, ref, rtol=RTOL, atol=ATOL), (loss, ref)

    # Case 2: f32, B not a multiple of 8 and D not a multiple of 128
    # (partial last block, masked writeback, padded lanes).
    B2, D2 = 13, 24
    pred2 = jax.random.normal(keys[3], (B2, D2), dtype=jnp.float32)
    positive2 = jax.random.normal(keys[4], (B2, D2), dtype=jnp.float32)
    negative2 = jax.random.normal(keys[5], (B2, D2), dtype=jnp.float32)
    loss2 = jax.block_until_ready(contrastive_loss_cosine(pred2, positive2, negative2, temp))
    ref2 = _reference(pred2, positive2, negative2, temp)
    assert loss2.shape == (B2,), loss2.shape
    assert jnp.allclose(loss2, ref2, rtol=RTOL, atol=ATOL), (loss2, ref2)

    # Case 3: tiny batch (B < sublane multiple) -> single full-array block.
    B3, D3 = 4, 32
    pred3 = jax.random.normal(keys[6], (B3, D3), dtype=jnp.float32)
    positive3 = jax.random.normal(keys[7], (B3, D3), dtype=jnp.float32)
    negative3 = jax.random.normal(keys[8], (B3, D3), dtype=jnp.float32)
    loss3 = jax.block_until_ready(contrastive_loss_cosine(pred3, positive3, negative3, temp))
    ref3 = _reference(pred3, positive3, negative3, temp)
    assert loss3.shape == (B3,), loss3.shape
    assert jnp.allclose(loss3, ref3, rtol=RTOL, atol=ATOL), (loss3, ref3)

    print("KERNEL_OK")
</pallas_src>

<mosaic_0001>
module attributes {stable_mosaic.version = 11 : i64} {
  func.func @_contrastive_cosine_kernel(%arg0: i32, %arg1: memref<16x64xbf16, #tpu.memory_space<vmem>>, %arg2: memref<16x64xbf16, #tpu.memory_space<vmem>>, %arg3: memref<16x64xbf16, #tpu.memory_space<vmem>>, %arg4: memref<16x1xf32, #tpu.memory_space<vmem>>) attributes {dimension_semantics = [#tpu.dimension_semantics<parallel>], iteration_bounds = array<i64: 2>, scalar_prefetch = 0 : i64, scratch_operands = 0 : i64, tpu.core_type = #tpu.core_type<tc>, window_params = [{transform_indices = @transform_0, window_bounds = array<i64: 16, 64>}, {transform_indices = @transform_1, window_bounds = array<i64: 16, 64>}, {transform_indices = @transform_2, window_bounds = array<i64: 16, 64>}, {transform_indices = @transform_3, window_bounds = array<i64: 16, 1>}]} {
    %c0 = arith.constant 0 : index
    %c0_0 = arith.constant 0 : index
    %0 = vector.load %arg1[%c0, %c0_0] : memref<16x64xbf16, #tpu.memory_space<vmem>>, vector<16x64xbf16>
    %1 = arith.extf %0 : vector<16x64xbf16> to vector<16x64xf32>
    %c0_1 = arith.constant 0 : index
    %c0_2 = arith.constant 0 : index
    %2 = vector.load %arg2[%c0_1, %c0_2] : memref<16x64xbf16, #tpu.memory_space<vmem>>, vector<16x64xbf16>
    %3 = arith.extf %2 : vector<16x64xbf16> to vector<16x64xf32>
    %c0_3 = arith.constant 0 : index
    %c0_4 = arith.constant 0 : index
    %4 = vector.load %arg3[%c0_3, %c0_4] : memref<16x64xbf16, #tpu.memory_space<vmem>>, vector<16x64xbf16>
    %5 = arith.extf %4 : vector<16x64xbf16> to vector<16x64xf32>
    %6 = arith.mulf %1, %3 : vector<16x64xf32>
    %cst = arith.constant dense<0.000000e+00> : vector<16xf32>
    %7 = vector.multi_reduction <add>, %6, %cst [1] : vector<16x64xf32> to vector<16xf32>
    %8 = vector.shape_cast %7 : vector<16xf32> to vector<16x1xf32>
    %9 = arith.mulf %1, %5 : vector<16x64xf32>
    %cst_5 = arith.constant dense<0.000000e+00> : vector<16xf32>
    %10 = vector.multi_reduction <add>, %9, %cst_5 [1] : vector<16x64xf32> to vector<16xf32>
    %11 = vector.shape_cast %10 : vector<16xf32> to vector<16x1xf32>
    %12 = arith.mulf %1, %1 : vector<16x64xf32>
    %cst_6 = arith.constant dense<0.000000e+00> : vector<16xf32>
    %13 = vector.multi_reduction <add>, %12, %cst_6 [1] : vector<16x64xf32> to vector<16xf32>
    %14 = vector.shape_cast %13 : vector<16xf32> to vector<16x1xf32>
    %15 = arith.mulf %3, %3 : vector<16x64xf32>
    %cst_7 = arith.constant dense<0.000000e+00> : vector<16xf32>
    %16 = vector.multi_reduction <add>, %15, %cst_7 [1] : vector<16x64xf32> to vector<16xf32>
    %17 = vector.shape_cast %16 : vector<16xf32> to vector<16x1xf32>
    %18 = arith.mulf %5, %5 : vector<16x64xf32>
    %cst_8 = arith.constant dense<0.000000e+00> : vector<16xf32>
    %19 = vector.multi_reduction <add>, %18, %cst_8 [1] : vector<16x64xf32> to vector<16xf32>
    %20 = vector.shape_cast %19 : vector<16xf32> to vector<16x1xf32>
    %cst_9 = arith.constant 9.99999993E-9 : f32
    %cst_10 = arith.constant 9.99999993E-9 : f32
    %21 = arith.mulf %cst_9, %cst_10 : f32
    %22 = arith.mulf %14, %17 : vector<16x1xf32>
    %23 = vector.broadcast %21 : f32 to vector<16x1xf32>
    %24 = arith.maximumf %22, %23 : vector<16x1xf32>
    %25 = math.rsqrt %24 : vector<16x1xf32>
    %26 = arith.mulf %8, %25 : vector<16x1xf32>
    %27 = arith.mulf %14, %20 : vector<16x1xf32>
    %28 = vector.broadcast %21 : f32 to vector<16x1xf32>
    %29 = arith.maximumf %27, %28 : vector<16x1xf32>
    %30 = math.rsqrt %29 : vector<16x1xf32>
    %31 = arith.mulf %11, %30 : vector<16x1xf32>
    %32 = arith.subf %31, %26 : vector<16x1xf32>
    %cst_11 = arith.constant 2.000000e+00 : f32
    %33 = vector.broadcast %cst_11 : f32 to vector<16x1xf32>
    %34 = arith.mulf %32, %33 : vector<16x1xf32>
    %cst_12 = arith.constant 0.000000e+00 : f32
    %35 = vector.broadcast %cst_12 : f32 to vector<16x1xf32>
    %36 = arith.maximumf %34, %35 : vector<16x1xf32>
    %37 = math.absf %34 : vector<16x1xf32>
    %cst_13 = arith.constant 0.000000e+00 : f32
    %38 = vector.broadcast %cst_13 : f32 to vector<16x1xf32>
    %39 = arith.subf %38, %37 : vector<16x1xf32>
    %40 = math.exp %39 : vector<16x1xf32>
    %41 = math.log1p %40 : vector<16x1xf32>
    %42 = arith.addf %36, %41 : vector<16x1xf32>
    %c0_14 = arith.constant 0 : index
    %c0_15 = arith.constant 0 : index
    %43 = vector.load %arg4[%c0_14, %c0_15] : memref<16x1xf32, #tpu.memory_space<vmem>>, vector<16x1xf32>
    tpu.vector_store %arg4[%c0_14, %c0_15], %42 {strides = array<i32>} : memref<16x1xf32, #tpu.memory_space<vmem>>, vector<16x1xf32>,
    return
  }
  func.func @transform_0(%arg0: i32) -> (i32, i32) {
    %c0_i32 = arith.constant 0 : i32
    %c0_i32_0 = arith.constant 0 : i32
    return %arg0, %c0_i32 : i32, i32
  }
  func.func @transform_1(%arg0: i32) -> (i32, i32) {
    %c0_i32 = arith.constant 0 : i32
    %c0_i32_0 = arith.constant 0 : i32
    return %arg0, %c0_i32 : i32, i32
  }
  func.func @transform_2(%arg0: i32) -> (i32, i32) {
    %c0_i32 = arith.constant 0 : i32
    %c0_i32_0 = arith.constant 0 : i32
    return %arg0, %c0_i32 : i32, i32
  }
  func.func @transform_3(%arg0: i32) -> (i32, i32) {
    %c0_i32 = arith.constant 0 : i32
    %c0_i32_0 = arith.constant 0 : i32
    return %arg0, %c0_i32 : i32, i32
  }
}

</mosaic_0001>

<llo_original>
// kernel: tpu_custom_call.1
$region0: #{tpu_custom_call.1}
  #allocation0 [shape = 'u32[]', space=smem, size = 0x4, offset = 0x4, fixed_abs, tag = 'smem constant byte address 0x4 - core index']
  #allocation1 [shape = 'u32[144,128]{1,0:T(1,128)}', space=vmem, size = 0x12000, scoped, tag = 'internal scratch']
  %s0 = inlined_call_operand.hbm [shape: bf16[32,64], index: 0, kind: input, shape index: {}]
  %s1 = inlined_call_operand.hbm [shape: bf16[32,64], index: 1, kind: input, shape index: {}]
  %s2 = inlined_call_operand.hbm [shape: bf16[32,64], index: 2, kind: input, shape index: {}]
  %s3 = inlined_call_operand.vmem [shape: f32[32,1], index: 3, kind: output, shape index: {}]
  %s4 = sld [smem:[#allocation0]]
  $region57: #{tpu_custom_call.1} parent=0
    _
  %s6 = ssub.s32 1, %s4
  %s7 = scalar_select 0, %s6, %s4
  $region1: #{tpu_custom_call.1} parent=0
    #allocation2 [shape = 'u8[8192]{0}', space=vmem, size = 0x2000, scoped, tag = 'input window, operand 0']
    #allocation3 [shape = 's32[2]{0}', space=sflag, size = 0x8, scoped, tag = 'scoped memory for tpu_custom_call.1']
    #allocation4 [shape = 'u8[8192]{0}', space=vmem, size = 0x2000, scoped, tag = 'input window, operand 1']
    #allocation5 [shape = 's32[2]{0}', space=sflag, size = 0x8, scoped, tag = 'scoped memory for tpu_custom_call.1']
    #allocation6 [shape = 'u8[8192]{0}', space=vmem, size = 0x2000, scoped, tag = 'input window, operand 2']
    %8 = vsyncpa [#allocation3], 0
    %s9 = scalar_lea.sflag [#allocation3], 1
    %10 = vsyncpa %s9, 0
    %11 = vsyncpa [#allocation5], 0
    %s12 = scalar_lea.sflag [#allocation5], 1
    %13 = vsyncpa %s12, 0
    loop: start=0, step=1, limit=4
    $region2: #{tpu_custom_call.1} parent=1 // loop_pre_header
      _
    $region3: #{tpu_custom_call.1} parent=1 // loop_header
      %s15 = sphi 0, %s19
      %p16 = scmp.ge.s32.totalorder %s15, 4
      %s25 = sphi 0, %s27
      %s28 = sphi 0, %s25
      %s29 = sphi 0, %s28
      %s45 = sphi 0, %s29
      %s51 = sphi 0, %s53
      %s54 = sphi 0, %s51
      %s55 = sphi 0, %s54
      %s71 = sphi 0, %s55
      %s77 = sphi 0, %s79
      %s80 = sphi 0, %s77
      %s81 = sphi 0, %s80
      %s97 = sphi 0, %s81
      %s103 = sphi 0, %s105
      %s106 = sphi 0, %s103
      %s107 = sphi 0, %s106
      %s123 = sphi 0, %s107
    $region4: #{tpu_custom_call.1} parent=1 // loop_header_branch
      %18 = sbr.rel (%p16) target = $region8
    $region5: #{tpu_custom_call.1} parent=1 // loop_body
      %s20 = ssub.s32 %s15, 1
      %s21 = ssub.s32 %s15, 2
      %s22 = sadd.s32 %s15, 1
      %s23 = ssub.s32 %s15, %s22
      %p24 = scmp.eq.s32.totalorder %s23, 0
      %s26 = sadd.s32 %s25, 1
      %s27 = scalar_select %p24, %s25, %s26
      %p30 = pneg %p24
      %p31 = scmp.eq.s32.totalorder %s15, 1
      %p32 = por %p30, %p31
      %p33 = scmp.ne.s32.totalorder %s25, %s28
      %p34 = scmp.eq.s32.totalorder %s15, 0
      %p35 = por %p33, %p34
      %p36 = scmp.ne.s32.totalorder %s25, %s28
      %p37 = scmp.eq.s32.totalorder %s20, 1
      %p38 = por %p36, %p37
      %p39 = scmp.ne.s32.totalorder %s28, %s29
      %p40 = scmp.eq.s32.totalorder %s20, 0
      %p41 = por %p39, %p40
      %p42 = scmp.ne.s32.totalorder %s28, %s29
      %p43 = scmp.eq.s32.totalorder %s21, 1
      %p44 = por %p42, %p43
      %p46 = scmp.ne.s32.totalorder %s29, %s45
      %p47 = scmp.eq.s32.totalorder %s21, 0
      %p48 = por %p46, %p47
      %s49 = ssub.s32 %s15, %s22
      %p50 = scmp.eq.s32.totalorder %s49, 0
      %s52 = sadd.s32 %s51, 1
      %s53 = scalar_select %p50, %s51, %s52
      %p56 = pneg %p50
      %p57 = scmp.eq.s32.totalorder %s15, 1
      %p58 = por %p56, %p57
      %p59 = scmp.ne.s32.totalorder %s51, %s54
      %p60 = scmp.eq.s32.totalorder %s15, 0
      %p61 = por %p59, %p60
      %p62 = scmp.ne.s32.totalorder %s51, %s54
      %p63 = scmp.eq.s32.totalorder %s20, 1
      %p64 = por %p62, %p63
      %p65 = scmp.ne.s32.totalorder %s54, %s55
      %p66 = scmp.eq.s32.totalorder %s20, 0
      %p67 = por %p65, %p66
      %p68 = scmp.ne.s32.totalorder %s54, %s55
      %p69 = scmp.eq.s32.totalorder %s21, 1
      %p70 = por %p68, %p69
      %p72 = scmp.ne.s32.totalorder %s55, %s71
      %p73 = scmp.eq.s32.totalorder %s21, 0
      %p74 = por %p72, %p73
      %s75 = ssub.s32 %s15, %s22
      %p76 = scmp.eq.s32.totalorder %s75, 0
      %s78 = sadd.s32 %s77, 1
      %s79 = scalar_select %p76, %s77, %s78
      %p82 = pneg %p76
      %p83 = scmp.eq.s32.totalorder %s15, 1
      %p84 = por %p82, %p83
      %p85 = scmp.ne.s32.totalorder %s77, %s80
      %p86 = scmp.eq.s32.totalorder %s15, 0
      %p87 = por %p85, %p86
      %p88 = scmp.ne.s32.totalorder %s77, %s80
      %p89 = scmp.eq.s32.totalorder %s20, 1
      %p90 = por %p88, %p89
      %p91 = scmp.ne.s32.totalorder %s80, %s81
      %p92 = scmp.eq.s32.totalorder %s20, 0
      %p93 = por %p91, %p92
      %p94 = scmp.ne.s32.totalorder %s80, %s81
      %p95 = scmp.eq.s32.totalorder %s21, 1
      %p96 = por %p94, %p95
      %p98 = scmp.ne.s32.totalorder %s81, %s97
      %p99 = scmp.eq.s32.totalorder %s21, 0
      %p100 = por %p98, %p99
      %s101 = ssub.s32 %s15, %s22
      %p102 = scmp.eq.s32.totalorder %s101, 0
      %s104 = sadd.s32 %s103, 1
      %s105 = scalar_select %p102, %s103, %s104
      %p108 = pneg %p102
      %p109 = scmp.eq.s32.totalorder %s15, 1
      %p110 = por %p108, %p109
      %p111 = scmp.ne.s32.totalorder %s103, %s106
      %p112 = scmp.eq.s32.totalorder %s15, 0
      %p113 = por %p111, %p112
      %p114 = scmp.ne.s32.totalorder %s103, %s106
      %p115 = scmp.eq.s32.totalorder %s20, 1
      %p116 = por %p114, %p115
      %p117 = scmp.ne.s32.totalorder %s106, %s107
      %p118 = scmp.eq.s32.totalorder %s20, 0
      %p119 = por %p117, %p118
      %p120 = scmp.ne.s32.totalorder %s106, %s107
      %p121 = scmp.eq.s32.totalorder %s21, 1
      %p122 = por %p120, %p121
      %p124 = scmp.ne.s32.totalorder %s107, %s123
      %p125 = scmp.eq.s32.totalorder %s21, 0
      %p126 = por %p124, %p125
      %p127 = scmp.le.s32.totalorder 1, %s15
      %p128 = scmp.lt.s32.totalorder %s15, 3
      %p129 = pnand %p127, %p128
      %p130 = pneg %p129
      // Predicated region
      $region9: #{tpu_custom_call.1} parent=5 // pred_check
        _
      $region10: #{tpu_custom_call.1} parent=5 // pred_check_branch
        %132 = sbr.rel (%p129) target = $region12
      $region11: #{tpu_custom_call.1} parent=5 // pred_region
        %s133 = ssub.s32 %s15, 1
      $region12: #{tpu_custom_call.1} parent=5 // pred_fallthru
        _
      %p134 = scmp.lt.s32.totalorder %s15, 2
      // Predicated region
      $region13: #{tpu_custom_call.1} parent=5 // pred_check
        %p135 = pneg %p134
      $region14: #{tpu_custom_call.1} parent=5 // pred_check_branch
        %137 = sbr.rel (%p135) target = $region16
      $region15: #{tpu_custom_call.1} parent=5 // pred_region
        // Predicated region
        $region17: #{tpu_custom_call.1} parent=15 // pred_check
          %p138 = pneg %p35
        $region18: #{tpu_custom_call.1} parent=15 // pred_check_branch
          %140 = sbr.rel (%p138) target = $region20
        $region19: #{tpu_custom_call.1} parent=15 // pred_region
          %s141 = sand.u32 %s25, 1
          %s142 = scalar_lea.sflag [#allocation3], %s141
          %s143 = sand.u32 %s25, 1
          %s144 = smul.addr %s143, 8
          %s145 = scalar_lea.vmem [#allocation2], %s144
          %s146 = smul.u32 2, %s15
          %s148 = ssub.s32 128, 128
          %149 = vsyncadd %s142, %s148
          %s150 = smul.addr %s146, 64
          %s151 = scalar_lea.hbm %s0, %s150
          %s152 = sshll.u32 %s145, 4
          %s153 = int_to_ptr.vmem [resolvable:$true] %s152
          %158 = dma.hbm_to_vmem [thread:$0]  %s151, 128, %s153, %s142, 64, 64, 4
        $region20: #{tpu_custom_call.1} parent=15 // pred_fallthru
          _
        // Predicated region
        $region21: #{tpu_custom_call.1} parent=15 // pred_check
          %p159 = pneg %p61
        $region22: #{tpu_custom_call.1} parent=15 // pred_check_branch
          %161 = sbr.rel (%p159) target = $region24
        $region23: #{tpu_custom_call.1} parent=15 // pred_region
          %s162 = sand.u32 %s15, 1
          %s163 = scalar_lea.sflag [#allocation5], %s162
          %s164 = sand.u32 %s51, 1
          %s165 = smul.addr %s164, 8
          %s166 = scalar_lea.vmem [#allocation4], %s165
          %s167 = smul.u32 2, %s15
          %s169 = ssub.s32 128, 128
          %170 = vsyncadd %s163, %s169
          %s171 = smul.addr %s167, 64
          %s172 = scalar_lea.hbm %s1, %s171
          %s173 = sshll.u32 %s166, 4
          %s174 = int_to_ptr.vmem [resolvable:$true] %s173
          %179 = dma.hbm_to_vmem [thread:$0]  %s172, 128, %s174, %s163, 64, 64, 4
        $region24: #{tpu_custom_call.1} parent=15 // pred_fallthru
          _
        // Predicated region
        $region25: #{tpu_custom_call.1} parent=15 // pred_check
          %p180 = pneg %p87
        $region26: #{tpu_custom_call.1} parent=15 // pred_check_branch
          %182 = sbr.rel (%p180) target = $region28
        $region27: #{tpu_custom_call.1} parent=15 // pred_region
          %s183 = sand.u32 %s15, 1
          %s184 = scalar_lea.sflag [#allocation5], %s183
          %s185 = sand.u32 %s77, 1
          %s186 = smul.addr %s185, 8
          %s187 = scalar_lea.vmem [#allocation6], %s186
          %s188 = smul.u32 2, %s15
          %s190 = ssub.s32 128, 128
          %191 = vsyncadd %s184, %s190
          %s192 = smul.addr %s188, 64
          %s193 = scalar_lea.hbm %s2, %s192
          %s194 = sshll.u32 %s187, 4
          %s195 = int_to_ptr.vmem [resolvable:$true] %s194
          %200 = dma.hbm_to_vmem [thread:$0]  %s193, 128, %s195, %s184, 64, 64, 4
        $region28: #{tpu_custom_call.1} parent=15 // pred_fallthru
          _
      $region16: #{tpu_custom_call.1} parent=5 // pred_fallthru
        _
      %p201 = scmp.le.s32.totalorder 1, %s15
      %p202 = scmp.lt.s32.totalorder %s15, 3
      %p203 = pnand %p201, %p202
      %p204 = pneg %p203
      // Predicated region
      $region29: #{tpu_custom_call.1} parent=5 // pred_check
        _
      $region30: #{tpu_custom_call.1} parent=5 // pred_check_branch
        %206 = sbr.rel (%p203) target = $region32
      $region31: #{tpu_custom_call.1} parent=5 // pred_region
        %s207 = ssub.s32 %s15, 1
        %s208 = sand.u32 %s28, 1
        %s209 = scalar_lea.sflag [#allocation3], %s208
        %s210 = sand.u32 %s28, 1
        %s211 = smul.addr %s210, 8
        %s212 = scalar_lea.vmem [#allocation2], %s211
        // Predicated region
        $region33: #{tpu_custom_call.1} parent=31 // pred_check
          %p213 = pneg %p41
        $region34: #{tpu_custom_call.1} parent=31 // pred_check_branch
          %215 = sbr.rel (%p213) target = $region36
        $region35: #{tpu_custom_call.1} parent=31 // pred_region
          %216 = dma.done %s209, 128
        $region36: #{tpu_custom_call.1} parent=31 // pred_fallthru
          _
        %s217 = sand.u32 %s20, 1
        %s218 = scalar_lea.sflag [#allocation5], %s217
        %s219 = sand.u32 %s54, 1
        %s220 = smul.addr %s219, 8
        %s221 = scalar_lea.vmem [#allocation4], %s220
        // Predicated region
        $region37: #{tpu_custom_call.1} parent=31 // pred_check
          %p222 = pneg %p67
        $region38: #{tpu_custom_call.1} parent=31 // pred_check_branch
          %224 = sbr.rel (%p222) target = $region40
        $region39: #{tpu_custom_call.1} parent=31 // pred_region
          %225 = dma.done %s218, 128
        $region40: #{tpu_custom_call.1} parent=31 // pred_fallthru
          _
        %s226 = sand.u32 %s20, 1
        %s227 = scalar_lea.sflag [#allocation5], %s226
        %s228 = sand.u32 %s80, 1
        %s229 = smul.addr %s228, 8
        %s230 = scalar_lea.vmem [#allocation6], %s229
        // Predicated region
        $region41: #{tpu_custom_call.1} parent=31 // pred_check
          %p231 = pneg %p93
        $region42: #{tpu_custom_call.1} parent=31 // pred_check_branch
          %233 = sbr.rel (%p231) target = $region44
        $region43: #{tpu_custom_call.1} parent=31 // pred_region
          %234 = dma.done %s227, 128
        $region44: #{tpu_custom_call.1} parent=31 // pred_fallthru
          _
        %s235 = sand.u32 %s28, 1
        %s236 = scalar_lea.sflag [#allocation3], %s235
        %s237 = sand.u32 %s28, 1
        %s238 = smul.addr %s237, 8
        %s239 = scalar_lea.vmem [#allocation2], %s238
        %p240 = pneg %p41
        %p241 = pneg %p38
        %s242 = sand.u32 %s20, 1
        %s243 = scalar_lea.sflag [#allocation5], %s242
        %s244 = sand.u32 %s54, 1
        %s245 = smul.addr %s244, 8
        %s246 = scalar_lea.vmem [#allocation4], %s245
        %p247 = pneg %p67
        %p248 = pneg %p64
        %s249 = sand.u32 %s20, 1
        %s250 = scalar_lea.sflag [#allocation5], %s249
        %s251 = sand.u32 %s80, 1
        %s252 = smul.addr %s251, 8
        %s253 = scalar_lea.vmem [#allocation6], %s252
        %p254 = pneg %p93
        %p255 = pneg %p90
        %p256 = pneg %p119
        %p257 = pneg %p116
        %s258 = smul.u32 2, %s20
        %p259 = scmp.lt.s32.totalorder %s258, 3
        %s260 = scalar_select %p259, %s258, 3
        %s261 = smul.addr %s260, 8
        %s262 = scalar_lea.vmem %s3, %s261
        %s263 = smul.u32 2, %s20
        %s264 = smul.u32 2, %s20
        %s265 = smul.u32 2, %s20
        %s266 = smul.u32 2, %s20
        %p267 = scmp.lt.s32.totalorder %s266, 3
        %s268 = scalar_select %p267, %s266, 3
        %s269 = smul.addr %s268, 8
        %s270 = scalar_lea.vmem %s3, %s269
        %s271 = smul.u32 2, %s20
        %v272 = vld [vmem:[%s212] sm:$0xf]
        %v273 = vld [vmem:[%s212 + $0x4] sm:$0xf]
        %v274 = vunpack.c.l.bf16 %v272
        %v275 = vunpack.c.l.bf16 %v273
        %v276 = vld [vmem:[%s221] sm:$0xf]
        %v277 = vld [vmem:[%s221 + $0x4] sm:$0xf]
        %v278 = vunpack.c.l.bf16 %v276
        %v279 = vunpack.c.l.bf16 %v277
        %v280 = vld [vmem:[%s230] sm:$0xf]
        %v281 = vld [vmem:[%s230 + $0x4] sm:$0xf]
        %v282 = vunpack.c.l.bf16 %v280
        %v283 = vunpack.c.l.bf16 %v281
        %v284 = vmul.f32 %v274, %v278
        %v285 = vmul.f32 %v275, %v279
        %vm286 = vcmask 523264
        %v287 = vsel %vm286, %v284, 0.0
        %288 = vadd.xlane.f32.xlu0 %v287
        %v289 = vpop.xlane.xlu0 %288
        %v290 = vsel %vm286, %v285, 0.0
        %291 = vadd.xlane.f32.xlu0 %v290
        %v292 = vpop.xlane.xlu0 %291
        %v293 = vmul.f32 %v274, %v282
        %v294 = vmul.f32 %v275, %v283
        %v295 = vsel %vm286, %v293, 0.0
        %296 = vadd.xlane.f32.xlu0 %v295
        %v297 = vpop.xlane.xlu0 %296
        %v298 = vsel %vm286, %v294, 0.0
        %299 = vadd.xlane.f32.xlu0 %v298
        %v300 = vpop.xlane.xlu0 %299
        %v301 = vmul.f32 %v274, %v274
        %v302 = vmul.f32 %v275, %v275
        %v303 = vsel %vm286, %v301, 0.0
        %304 = vadd.xlane.f32.xlu0 %v303
        %v305 = vpop.xlane.xlu0 %304
        %v306 = vsel %vm286, %v302, 0.0
        %307 = vadd.xlane.f32.xlu0 %v306
        %v308 = vpop.xlane.xlu0 %307
        %v309 = vmul.f32 %v278, %v278
        %v310 = vmul.f32 %v279, %v279
        %v311 = vsel %vm286, %v309, 0.0
        %312 = vadd.xlane.f32.xlu0 %v311
        %v313 = vpop.xlane.xlu0 %312
        %v314 = vsel %vm286, %v310, 0.0
        %315 = vadd.xlane.f32.xlu0 %v314
        %v316 = vpop.xlane.xlu0 %315
        %v317 = vmul.f32 %v282, %v282
        %v318 = vmul.f32 %v283, %v283
        %v319 = vsel %vm286, %v317, 0.0
        %320 = vadd.xlane.f32.xlu0 %v319
        %v321 = vpop.xlane.xlu0 %320
        %v322 = vsel %vm286, %v318, 0.0
        %323 = vadd.xlane.f32.xlu0 %v322
        %v324 = vpop.xlane.xlu0 %323
        %v325 = vmul.f32 %v305, %v313
        %v326 = vmul.f32 %v308, %v316
        %v327 = vmax.f32 %v325, 1e-16
        %v328 = vmax.f32 %v326, 1e-16
        %v329 = vrsqrt.pop %v327
        %v330 = vrsqrt.pop %v328
        %v331 = vmul.f32 %v289, %v329
        %v332 = vmul.f32 %v292, %v330
        %v333 = vmul.f32 %v305, %v321
        %v334 = vmul.f32 %v308, %v324
        %v335 = vmax.f32 %v333, 1e-16
        %v336 = vmax.f32 %v334, 1e-16
        %v337 = vrsqrt.pop %v335
        %v338 = vrsqrt.pop %v336
        %v339 = vmul.f32 %v297, %v337
        %v340 = vmul.f32 %v300, %v338
        %v341 = vsub.f32 %v339, %v331
        %v342 = vsub.f32 %v340, %v332
        %v343 = vmul.f32 %v341, 2.0
        %v344 = vmul.f32 %v342, 2.0
        %v345 = vmax.f32 %v343, 0.0
        %v346 = vmax.f32 %v344, 0.0
        %v347 = vand.u32 2147483647, %v343
        %v348 = vand.u32 2147483647, %v344
        %v349 = vsub.f32 0.0, %v347
        %v350 = vsub.f32 0.0, %v348
        %v351 = vmul.f32 %v349, 1.442695
        %v352 = vpow.pop %v351
        %v353 = vmul.f32 %v350, 1.442695
        %v354 = vpow.pop %v353
        %v355 = vadd.f32 %v352, 1.0
        %v356 = vlog2.pop %v355
        %v357 = vmul.f32 %v356, 0.6931472
        %v358 = vmul.f32 -0.5, %v352
        %v359 = vadd.f32 %v358, 1.0
        %v360 = vmul.f32 %v359, %v352
        %v361 = vand.u32 2147483647, %v352
        %vm362 = vcmp.lt.f32.partialorder %v361, 0.0004427343
        %v363 = vsel %vm362, %v360, %v357
        %v364 = vadd.f32 %v354, 1.0
        %v365 = vlog2.pop %v364
        %v366 = vmul.f32 %v365, 0.6931472
        %v367 = vmul.f32 -0.5, %v354
        %v368 = vadd.f32 %v367, 1.0
        %v369 = vmul.f32 %v368, %v354
        %v370 = vand.u32 2147483647, %v354
        %vm371 = vcmp.lt.f32.partialorder %v370, 0.0004427343
        %v372 = vsel %vm371, %v369, %v366
        %v373 = vadd.f32 %v345, %v363
        %v374 = vadd.f32 %v346, %v372
        %vm375 = vcmask 7168
        %376 = vst.msk [vmem:[%s270] sm:$0xff] %vm375, %v373
        %377 = vst.msk [vmem:[%s270 + $0x8] sm:$0xff] %vm375, %v374
        %s378 = smul.u32 2, %s20
        %p379 = scmp.lt.s32.totalorder %s378, 3
        %s380 = scalar_select %p379, %s378, 3
        %s381 = smul.addr %s380, 8
        %s382 = scalar_lea.vmem %s3, %s381
        // Predicated region
        $region45: #{tpu_custom_call.1} parent=31 // pred_check
          %p383 = pneg %p116
        $region46: #{tpu_custom_call.1} parent=31 // pred_check_branch
          %385 = sbr.rel (%p383) target = $region48
        $region47: #{tpu_custom_call.1} parent=31 // pred_region
          %s386 = smul.u32 2, %s20
        $region48: #{tpu_custom_call.1} parent=31 // pred_fallthru
          _
      $region32: #{tpu_custom_call.1} parent=5 // pred_fallthru
        _
      %p387 = scmp.le.s32.totalorder 2, %s15
      // Predicated region
      $region49: #{tpu_custom_call.1} parent=5 // pred_check
        %p388 = pneg %p387
      $region50: #{tpu_custom_call.1} parent=5 // pred_check_branch
        %390 = sbr.rel (%p388) target = $region52
      $region51: #{tpu_custom_call.1} parent=5 // pred_region
        %s391 = ssub.s32 %s15, 2
        // Predicated region
        $region53: #{tpu_custom_call.1} parent=51 // pred_check
          %p392 = pneg %p122
        $region54: #{tpu_custom_call.1} parent=51 // pred_check_branch
          %394 = sbr.rel (%p392) target = $region56
        $region55: #{tpu_custom_call.1} parent=51 // pred_region
          %s395 = smul.u32 2, %s21
          %p396 = scmp.lt.s32.totalorder %s395, 3
          %s397 = scalar_select %p396, %s395, 3
          %s398 = smul.addr %s397, 8
          %s399 = scalar_lea.vmem %s3, %s398
        $region56: #{tpu_custom_call.1} parent=51 // pred_fallthru
          _
      $region52: #{tpu_custom_call.1} parent=5 // pred_fallthru
        _
    $region6: #{tpu_custom_call.1} parent=1 // loop_footer
      %s19 = sadd.s32 1, %s15
    $region7: #{tpu_custom_call.1} parent=1 // loop_footer_branch
      %14 = sbr.rel target = $region3
    $region8: #{tpu_custom_call.1} parent=1 // loop_exit
      _
    %400 = vsyncpa [#allocation3], 1
    %s401 = scalar_lea.sflag [#allocation3], 1
    %402 = vsyncpa %s401, 1
    %403 = vsyncpa [#allocation5], 1
    %s404 = scalar_lea.sflag [#allocation5], 1
    %405 = vsyncpa %s404, 1

</llo_original>
